<compile_context>
chip_gen: v7x
topology: tpu7x:2x2x1
jax: 0.10.0
libtpu: 0.0.40
codegen_flags: <defaults>
</compile_context>

<pallas_src>
import math

import jax
import jax.numpy as jnp
from jax.experimental import pallas as pl
from jax.experimental.pallas import tpu as pltpu


# ------------------------------ helpers -------------------------------------

def _round_up(x: int, m: int) -> int:
    return ((x + m - 1) // m) * m


def _pad2d(a, rows: int, cols: int):
    return jnp.pad(a, ((0, rows - a.shape[0]), (0, cols - a.shape[1])))


def _sublane(dtype) -> int:
    # 8 for f32, 16 for bf16, 32 for int8/fp8 (packed sublane multiple).
    return max(8, 32 // jnp.dtype(dtype).itemsize)


def _vmem_cap_bytes() -> int:
    """Usable per-core VMEM budget: 85% of physical, capped at ~110 MiB."""
    phys = 64 << 20  # conservative default (v7x per-TC VMEM)
    try:
        phys = int(pltpu.get_tpu_info().vmem_capacity_bytes)
    except Exception:
        pass
    return min(int(phys * 0.85), 110 << 20)


# ----------------------------- Pallas kernel --------------------------------

def _make_mlp_kernel(num_layers: int, compute_dtype):
    """Kernel: fused first Linear (+b0) -> [ReLU + Linear]* over resident weights."""

    def kernel(c1_ref, c2_ref, *refs):
        # refs = (w0a, w0b, b0, w1, b1, ..., w{L-1}, b{L-1}, out_ref)
        out_ref = refs[-1]
        wb = refs[:-1]

        # Layer 0: fused concat  ==  cat([c1, c2]) @ W0 + b0  (W0 split at D1).
        # NOTE: merging into one matmul over 2*D1 would need an in-VMEM lane
        # concat of non-128-multiple halves; the split form is exact and cheap.
        h = (jnp.dot(c1_ref[...], wb[0][...], preferred_element_type=jnp.float32)
             + jnp.dot(c2_ref[...], wb[1][...], preferred_element_type=jnp.float32)
             + wb[2][...])                                  # bias stored in f32

        idx = 3
        for _ in range(1, num_layers):
            # ReLU after the previous layer.  Cast-then-max is exact (the cast
            # is monotone and preserves 0) and runs bf16-wide on v6e/v7x VPUs
            # when compute_dtype is bf16.
            h_act = jnp.maximum(h.astype(compute_dtype), 0)
            h = (jnp.dot(h_act, wb[idx][...], preferred_element_type=jnp.float32)
                 + wb[idx + 1][...])
            idx += 2

        out_ref[...] = h.astype(out_ref.dtype)

    return kernel


# ------------------------------ host wrapper ---------------------------------

def mlp_pallas(c1, c2, params, d_out_pad: int, *, tv: int | None = None):
    """Run the fused MLP on (c1, c2): (V, D1) each.

    params: flat list [w0a, w0b, b0, w1, b1, ..., wL, bL] (already lane-padded,
    biases stored in f32).  Returns (V_pad, d_out_pad); caller slices to (V, D).
    """
    num_layers = (len(params) - 1) // 2
    V, D1 = c1.shape
    in_itemsize = jnp.dtype(c1.dtype).itemsize
    out_itemsize = in_itemsize
    param_bytes = sum(p.size * jnp.dtype(p.dtype).itemsize for p in params)
    max_wpad = max(max(p.shape[-1] for p in params), d_out_pad)
    compute_dtype = jnp.dtype(params[0].dtype)
    sub = _sublane(c1.dtype)
    cap = _vmem_cap_bytes()

    def need_bytes(TV: int, param_buf: int) -> int:
        io = (2 * (2 * TV * D1 * in_itemsize)           # two inputs, double-buffered
              + 2 * TV * d_out_pad * out_itemsize)      # output, double-buffered
        act = 2 * TV * max_wpad * 4                     # two live f32 h tiles
        return io + param_buf * param_bytes + act

    def pick_tv(param_buf: int) -> int:
        if tv is not None:
            TV = max(sub, _round_up(tv, sub))
        else:
            TV = min(_round_up(V, sub), 1024)
            if V >= 512:
                # >= 2 grid steps so "parallel" can shard across v7x's two TCs.
                TV = min(TV, max(256, _round_up(pl.cdiv(V, 2), sub)))
        # Shrink the row tile (not the declared limit) until everything fits.
        while TV > sub and need_bytes(TV, param_buf) > cap:
            TV = max(sub, _round_up(TV // 2, sub))
        return TV

    def run(single_buffer_params: bool):
        param_buf = 1 if single_buffer_params else 2
        if param_bytes * param_buf > cap:
            # TODO(synk): for very large width*depth, add a second grid axis
            # over weight column blocks instead of keeping all weights resident.
            raise ValueError("MLP weights do not fit in VMEM (resident design)")

        TV = pick_tv(param_buf)
        V_pad = _round_up(V, TV)
        cc1, cc2 = c1, c2
        if V_pad != V:
            pad = V_pad - V
            cc1 = jnp.pad(c1, ((0, pad), (0, 0)))
            cc2 = jnp.pad(c2, ((0, pad), (0, 0)))
        grid = (V_pad // TV,)

        in_specs = [
            pl.BlockSpec((TV, D1), lambda i: (i, 0)),
            pl.BlockSpec((TV, D1), lambda i: (i, 0)),
        ]
        for p in params:
            if single_buffer_params:
                # Constant block index -> no prefetch overlap needed; a single
                # buffer halves the weights' VMEM footprint.
                in_specs.append(pl.BlockSpec(p.shape, lambda i: (0, 0),
                                             pipeline_mode=pl.Buffered(1)))
            else:
                in_specs.append(pl.BlockSpec(p.shape, lambda i: (0, 0)))
        out_specs = pl.BlockSpec((TV, d_out_pad), lambda i: (i, 0))

        # Advisory cost estimate for XLA scheduling around the custom call.
        flops = 2 * (2 * V_pad * D1 * params[0].shape[1])       # both layer-0 halves
        for i in range(1, num_layers):
            w = params[2 * i + 1]
            flops += 2 * V_pad * w.shape[0] * w.shape[1]
        bytes_accessed = ((cc1.size + cc2.size) * in_itemsize
                          + param_bytes
                          + V_pad * d_out_pad * out_itemsize)

        need = need_bytes(TV, param_buf)
        vmem_limit = int(min(max(need + (4 << 20), 16 << 20), cap))

        return pl.pallas_call(
            _make_mlp_kernel(num_layers, compute_dtype),
            out_shape=jax.ShapeDtypeStruct((V_pad, d_out_pad), cc1.dtype),
            grid=grid,
            in_specs=in_specs,
            out_specs=out_specs,
            compiler_params=pltpu.CompilerParams(
                dimension_semantics=("parallel",),     # megacore sharding on v7x
                vmem_limit_bytes=vmem_limit,
            ),
            cost_estimate=pl.CostEstimate(
                flops=flops, transcendentals=0, bytes_accessed=bytes_accessed),
        )(cc1, cc2, *params)

    try:
        return run(True)
    except ValueError:
        raise
    except Exception:
        # pl.Buffered(1) pipeline_mode not supported on this jax/Mosaic version:
        # fall back to default (double-buffered) resident weights.
        return run(False)


# --------------------------- Module equivalent -------------------------------

class EuclideanDistance:
    """Euclidean distance: identity feature expansion and normalization."""

    def feature_expand_shape(self, D):
        return D

    def feature_expand(self, x):
        return x

    def normalize(self, x):
        return x


class MLPMergeEncoderPallas:
    def __init__(self, distance, *, S: int, A: int, D: int, width: int, depth: int,
                 key=None, dtype=jnp.float32, compute_dtype=None):
        self.distance = distance
        self.D = D
        D1 = distance.feature_expand_shape(D)
        self.D1 = D1
        in_features = 2 * D1
        # compute_dtype=jnp.bfloat16 enables native-rate MXU matmuls (f32 acc);
        # default keeps the caller dtype so numerics match the reference exactly.
        self.compute_dtype = jnp.dtype(compute_dtype if compute_dtype is not None
                                       else dtype)

        # Layer sizes: 2*D1 -> width -> (depth-1 hiddens) -> D  (depth+1 Linears)
        sizes = [in_features] + [width] * depth + [D]
        if key is None:
            key = jax.random.PRNGKey(0)

        # Unpadded params (kept for the pure-JAX reference).
        self.weights = []
        self.biases = []
        for i in range(len(sizes) - 1):
            fan_in, fan_out = sizes[i], sizes[i + 1]
            key, kw, kb = jax.random.split(key, 3)
            bound = 1.0 / math.sqrt(fan_in)
            # PyTorch Linear stores (out, in); we store (in, out) for x @ W.
            w = jax.random.uniform(kw, (fan_in, fan_out), dtype, -bound, bound)
            b = jax.random.uniform(kb, (fan_out,), dtype, -bound, bound)
            self.weights.append(w)
            self.biases.append(b)

        # Lane-dense padded params for the kernel (weights in compute_dtype,
        # biases in f32 so the per-step bias add never re-casts).
        num_layers = len(self.weights)
        Wp = _round_up(width, 128)
        Dp = _round_up(D, 128)
        self.d_out_pad = Dp

        cd = self.compute_dtype
        params = []
        out0_pad = Wp if num_layers > 1 else Dp
        w0, b0 = self.weights[0], self.biases[0]
        params.append(_pad2d(w0[:D1, :].astype(cd), D1, out0_pad))            # w0a
        params.append(_pad2d(w0[D1:, :].astype(cd), D1, out0_pad))            # w0b
        params.append(_pad2d(b0.astype(jnp.float32).reshape(1, -1), 1, out0_pad))
        for i in range(1, num_layers):
            w, b = self.weights[i], self.biases[i]
            out_pad = Dp if i == num_layers - 1 else Wp
            params.append(_pad2d(w.astype(cd), Wp, out_pad))
            params.append(_pad2d(b.astype(jnp.float32).reshape(1, -1), 1, out_pad))
        self.params = params

    def __call__(self, children1_VxD, children2_VxD, *, tv: int | None = None):
        e1 = self.distance.feature_expand(children1_VxD).astype(self.compute_dtype)
        e2 = self.distance.feature_expand(children2_VxD).astype(self.compute_dtype)
        V = e1.shape[0]
        out_pad = mlp_pallas(e1, e2, self.params, self.d_out_pad, tv=tv)   # hot path
        out = out_pad[:V, :self.D].astype(children1_VxD.dtype)             # drop padding
        return self.distance.normalize(out)

    def reference(self, children1_VxD, children2_VxD):
        """Pure-JAX reference for correctness checking (unpadded weights)."""
        e1 = self.distance.feature_expand(children1_VxD)
        e2 = self.distance.feature_expand(children2_VxD)
        h = jnp.concatenate([e1, e2], axis=-1).astype(jnp.float32)
        n = len(self.weights)
        for i, (w, b) in enumerate(zip(self.weights, self.biases)):
            h = h @ w.astype(jnp.float32) + b.astype(jnp.float32)
            if i < n - 1:
                h = jnp.maximum(h, 0.0)
        return self.distance.normalize(h)


# --------------------------------- main --------------------------------------

if __name__ == "__main__":
    key = jax.random.PRNGKey(0)
    k1, k2, k3, k4, kparams = jax.random.split(key, 5)

    # Small, forward-consistent shapes: V taxa pairs, D-dim embeddings.
    V, S, A, D, width, depth = 16, 8, 4, 8, 32, 2

    encoder = MLPMergeEncoderPallas(
        EuclideanDistance(), S=S, A=A, D=D, width=width, depth=depth, key=kparams
    )

    # Check 1: single grid step.
    children1 = jax.random.normal(k1, (V, D), jnp.float32)
    children2 = jax.random.normal(k2, (V, D), jnp.float32)
    out = encoder(children1, children2)
    jax.block_until_ready(out)
    ref = encoder.reference(children1, children2)
    assert out.shape == (V, D), out.shape
    assert jnp.allclose(out, ref.astype(out.dtype), atol=1e-4, rtol=1e-4), \
        "mismatch vs reference (single tile)"

    # Check 2: multi-step grid with row padding (V=40, tv=16 -> 3 grid steps).
    V2 = 40
    c1b = jax.random.normal(k3, (V2, D), jnp.float32)
    c2b = jax.random.normal(k4, (V2, D), jnp.float32)
    out2 = encoder(c1b, c2b, tv=16)
    jax.block_until_ready(out2)
    ref2 = encoder.reference(c1b, c2b)
    assert out2.shape == (V2, D), out2.shape
    assert jnp.allclose(out2, ref2.astype(out2.dtype), atol=1e-4, rtol=1e-4), \
        "mismatch vs reference (tiled grid)"

    print("KERNEL_OK")
</pallas_src>

<mosaic_0001>
module attributes {stable_mosaic.version = 11 : i64} {
  func.func @kernel(%arg0: i32, %arg1: memref<16x8xf32, #tpu.memory_space<vmem>>, %arg2: memref<16x8xf32, #tpu.memory_space<vmem>>, %arg3: memref<8x128xf32, #tpu.memory_space<vmem>>, %arg4: memref<8x128xf32, #tpu.memory_space<vmem>>, %arg5: memref<1x128xf32, #tpu.memory_space<vmem>>, %arg6: memref<128x128xf32, #tpu.memory_space<vmem>>, %arg7: memref<1x128xf32, #tpu.memory_space<vmem>>, %arg8: memref<128x128xf32, #tpu.memory_space<vmem>>, %arg9: memref<1x128xf32, #tpu.memory_space<vmem>>, %arg10: memref<16x128xf32, #tpu.memory_space<vmem>>) attributes {dimension_semantics = [#tpu.dimension_semantics<parallel>], iteration_bounds = array<i64: 1>, scalar_prefetch = 0 : i64, scratch_operands = 0 : i64, tpu.core_type = #tpu.core_type<tc>, window_params = [{transform_indices = @transform_0, window_bounds = array<i64: 16, 8>}, {transform_indices = @transform_1, window_bounds = array<i64: 16, 8>}, {pipeline_mode = #tpu.pipeline_mode<synchronous>, transform_indices = @transform_2, window_bounds = array<i64: 8, 128>}, {pipeline_mode = #tpu.pipeline_mode<synchronous>, transform_indices = @transform_3, window_bounds = array<i64: 8, 128>}, {pipeline_mode = #tpu.pipeline_mode<synchronous>, transform_indices = @transform_4, window_bounds = array<i64: 1, 128>}, {pipeline_mode = #tpu.pipeline_mode<synchronous>, transform_indices = @transform_5, window_bounds = array<i64: 128, 128>}, {pipeline_mode = #tpu.pipeline_mode<synchronous>, transform_indices = @transform_6, window_bounds = array<i64: 1, 128>}, {pipeline_mode = #tpu.pipeline_mode<synchronous>, transform_indices = @transform_7, window_bounds = array<i64: 128, 128>}, {pipeline_mode = #tpu.pipeline_mode<synchronous>, transform_indices = @transform_8, window_bounds = array<i64: 1, 128>}, {transform_indices = @transform_9, window_bounds = array<i64: 16, 128>}]} {
    %c0 = arith.constant 0 : index
    %c0_0 = arith.constant 0 : index
    %0 = vector.load %arg1[%c0, %c0_0] : memref<16x8xf32, #tpu.memory_space<vmem>>, vector<16x8xf32>
    %c0_1 = arith.constant 0 : index
    %c0_2 = arith.constant 0 : index
    %1 = vector.load %arg3[%c0_1, %c0_2] : memref<8x128xf32, #tpu.memory_space<vmem>>, vector<8x128xf32>
    %cst = arith.constant dense<0.000000e+00> : vector<16x128xf32>
    %2 = tpu.matmul %0, %1, %cst {dimension_numbers = #tpu.dot_dimension_numbers<[1], [0], [0], [1], [0, 0, 1, 1], [], []>} : vector<16x8xf32>, vector<8x128xf32>, vector<16x128xf32> -> vector<16x128xf32>
    %c0_3 = arith.constant 0 : index
    %c0_4 = arith.constant 0 : index
    %3 = vector.load %arg2[%c0_3, %c0_4] : memref<16x8xf32, #tpu.memory_space<vmem>>, vector<16x8xf32>
    %c0_5 = arith.constant 0 : index
    %c0_6 = arith.constant 0 : index
    %4 = vector.load %arg4[%c0_5, %c0_6] : memref<8x128xf32, #tpu.memory_space<vmem>>, vector<8x128xf32>
    %cst_7 = arith.constant dense<0.000000e+00> : vector<16x128xf32>
    %5 = tpu.matmul %3, %4, %cst_7 {dimension_numbers = #tpu.dot_dimension_numbers<[1], [0], [0], [1], [0, 0, 1, 1], [], []>} : vector<16x8xf32>, vector<8x128xf32>, vector<16x128xf32> -> vector<16x128xf32>
    %6 = arith.addf %2, %5 : vector<16x128xf32>
    %c0_8 = arith.constant 0 : index
    %c0_9 = arith.constant 0 : index
    %7 = vector.load %arg5[%c0_8, %c0_9] : memref<1x128xf32, #tpu.memory_space<vmem>>, vector<1x128xf32>
    %8 = vector.broadcast %7 : vector<1x128xf32> to vector<16x128xf32>
    %9 = arith.addf %6, %8 : vector<16x128xf32>
    %cst_10 = arith.constant 0.000000e+00 : f32
    %10 = vector.broadcast %cst_10 : f32 to vector<16x128xf32>
    %11 = arith.maximumf %9, %10 : vector<16x128xf32>
    %c0_11 = arith.constant 0 : index
    %c0_12 = arith.constant 0 : index
    %12 = vector.load %arg6[%c0_11, %c0_12] : memref<128x128xf32, #tpu.memory_space<vmem>>, vector<128x128xf32>
    %cst_13 = arith.constant dense<0.000000e+00> : vector<16x128xf32>
    %13 = tpu.matmul %11, %12, %cst_13 {dimension_numbers = #tpu.dot_dimension_numbers<[1], [0], [0], [1], [0, 0, 1, 1], [], []>} : vector<16x128xf32>, vector<128x128xf32>, vector<16x128xf32> -> vector<16x128xf32>
    %c0_14 = arith.constant 0 : index
    %c0_15 = arith.constant 0 : index
    %14 = vector.load %arg7[%c0_14, %c0_15] : memref<1x128xf32, #tpu.memory_space<vmem>>, vector<1x128xf32>
    %15 = vector.broadcast %14 : vector<1x128xf32> to vector<16x128xf32>
    %16 = arith.addf %13, %15 : vector<16x128xf32>
    %cst_16 = arith.constant 0.000000e+00 : f32
    %17 = vector.broadcast %cst_16 : f32 to vector<16x128xf32>
    %18 = arith.maximumf %16, %17 : vector<16x128xf32>
    %c0_17 = arith.constant 0 : index
    %c0_18 = arith.constant 0 : index
    %19 = vector.load %arg8[%c0_17, %c0_18] : memref<128x128xf32, #tpu.memory_space<vmem>>, vector<128x128xf32>
    %cst_19 = arith.constant dense<0.000000e+00> : vector<16x128xf32>
    %20 = tpu.matmul %18, %19, %cst_19 {dimension_numbers = #tpu.dot_dimension_numbers<[1], [0], [0], [1], [0, 0, 1, 1], [], []>} : vector<16x128xf32>, vector<128x128xf32>, vector<16x128xf32> -> vector<16x128xf32>
    %c0_20 = arith.constant 0 : index
    %c0_21 = arith.constant 0 : index
    %21 = vector.load %arg9[%c0_20, %c0_21] : memref<1x128xf32, #tpu.memory_space<vmem>>, vector<1x128xf32>
    %22 = vector.broadcast %21 : vector<1x128xf32> to vector<16x128xf32>
    %23 = arith.addf %20, %22 : vector<16x128xf32>
    %c0_22 = arith.constant 0 : index
    %c0_23 = arith.constant 0 : index
    %24 = vector.load %arg10[%c0_22, %c0_23] : memref<16x128xf32, #tpu.memory_space<vmem>>, vector<16x128xf32>
    tpu.vector_store %arg10[%c0_22, %c0_23], %23 {strides = array<i32>} : memref<16x128xf32, #tpu.memory_space<vmem>>, vector<16x128xf32>,
    return
  }
  func.func @transform_0(%arg0: i32) -> (i32, i32) {
    %c0_i32 = arith.constant 0 : i32
    %c0_i32_0 = arith.constant 0 : i32
    return %arg0, %c0_i32 : i32, i32
  }
  func.func @transform_1(%arg0: i32) -> (i32, i32) {
    %c0_i32 = arith.constant 0 : i32
    %c0_i32_0 = arith.constant 0 : i32
    return %arg0, %c0_i32 : i32, i32
  }
  func.func @transform_2(%arg0: i32) -> (i32, i32) {
    %c0_i32 = arith.constant 0 : i32
    %c0_i32_0 = arith.constant 0 : i32
    %c0_i32_1 = arith.constant 0 : i32
    return %c0_i32, %c0_i32_0 : i32, i32
  }
  func.func @transform_3(%arg0: i32) -> (i32, i32) {
    %c0_i32 = arith.constant 0 : i32
    %c0_i32_0 = arith.constant 0 : i32
    %c0_i32_1 = arith.constant 0 : i32
    return %c0_i32, %c0_i32_0 : i32, i32
  }
  func.func @transform_4(%arg0: i32) -> (i32, i32) {
    %c0_i32 = arith.constant 0 : i32
    %c0_i32_0 = arith.constant 0 : i32
    %c0_i32_1 = arith.constant 0 : i32
    return %c0_i32, %c0_i32_0 : i32, i32
  }
  func.func @transform_5(%arg0: i32) -> (i32, i32) {
    %c0_i32 = arith.constant 0 : i32
    %c0_i32_0 = arith.constant 0 : i32
    %c0_i32_1 = arith.constant 0 : i32
    return %c0_i32, %c0_i32_0 : i32, i32
  }
  func.func @transform_6(%arg0: i32) -> (i32, i32) {
    %c0_i32 = arith.constant 0 : i32
    %c0_i32_0 = arith.constant 0 : i32
    %c0_i32_1 = arith.constant 0 : i32
    return %c0_i32, %c0_i32_0 : i32, i32
  }
  func.func @transform_7(%arg0: i32) -> (i32, i32) {
    %c0_i32 = arith.constant 0 : i32
    %c0_i32_0 = arith.constant 0 : i32
    %c0_i32_1 = arith.constant 0 : i32
    return %c0_i32, %c0_i32_0 : i32, i32
  }
  func.func @transform_8(%arg0: i32) -> (i32, i32) {
    %c0_i32 = arith.constant 0 : i32
    %c0_i32_0 = arith.constant 0 : i32
    %c0_i32_1 = arith.constant 0 : i32
    return %c0_i32, %c0_i32_0 : i32, i32
  }
  func.func @transform_9(%arg0: i32) -> (i32, i32) {
    %c0_i32 = arith.constant 0 : i32
    %c0_i32_0 = arith.constant 0 : i32
    return %arg0, %c0_i32 : i32, i32
  }
}

module attributes {stable_mosaic.version = 11 : i64} {
  func.func @kernel(%arg0: i32, %arg1: memref<16x8xf32, #tpu.memory_space<vmem>>, %arg2: memref<16x8xf32, #tpu.memory_space<vmem>>, %arg3: memref<8x128xf32, #tpu.memory_space<vmem>>, %arg4: memref<8x128xf32, #tpu.memory_space<vmem>>, %arg5: memref<1x128xf32, #tpu.memory_space<vmem>>, %arg6: memref<128x128xf32, #tpu.memory_space<vmem>>, %arg7: memref<1x128xf32, #tpu.memory_space<vmem>>, %arg8: memref<128x128xf32, #tpu.memory_space<vmem>>, %arg9: memref<1x128xf32, #tpu.memory_space<vmem>>, %arg10: memref<16x128xf32, #tpu.memory_space<vmem>>) attributes {dimension_semantics = [#tpu.dimension_semantics<parallel>], iteration_bounds = array<i64: 1>, scalar_prefetch = 0 : i64, scratch_operands = 0 : i64, tpu.core_type = #tpu.core_type<tc>, window_params = [{transform_indices = @transform_0, window_bounds = array<i64: 16, 8>}, {transform_indices = @transform_1, window_bounds = array<i64: 16, 8>}, {pipeline_mode = #tpu.pipeline_mode<synchronous>, transform_indices = @transform_2, window_bounds = array<i64: 8, 128>}, {pipeline_mode = #tpu.pipeline_mode<synchronous>, transform_indices = @transform_3, window_bounds = array<i64: 8, 128>}, {pipeline_mode = #tpu.pipeline_mode<synchronous>, transform_indices = @transform_4, window_bounds = array<i64: 1, 128>}, {pipeline_mode = #tpu.pipeline_mode<synchronous>, transform_indices = @transform_5, window_bounds = array<i64: 128, 128>}, {pipeline_mode = #tpu.pipeline_mode<synchronous>, transform_indices = @transform_6, window_bounds = array<i64: 1, 128>}, {pipeline_mode = #tpu.pipeline_mode<synchronous>, transform_indices = @transform_7, window_bounds = array<i64: 128, 128>}, {pipeline_mode = #tpu.pipeline_mode<synchronous>, transform_indices = @transform_8, window_bounds = array<i64: 1, 128>}, {transform_indices = @transform_9, window_bounds = array<i64: 16, 128>}]} {
    %c0 = arith.constant 0 : index
    %c0_0 = arith.constant 0 : index
    %0 = vector.load %arg1[%c0, %c0_0] : memref<16x8xf32, #tpu.memory_space<vmem>>, vector<16x8xf32>
    %c0_1 = arith.constant 0 : index
    %c0_2 = arith.constant 0 : index
    %1 = vector.load %arg3[%c0_1, %c0_2] : memref<8x128xf32, #tpu.memory_space<vmem>>, vector<8x128xf32>
    %cst = arith.constant dense<0.000000e+00> : vector<16x128xf32>
    %2 = tpu.matmul %0, %1, %cst {dimension_numbers = #tpu.dot_dimension_numbers<[1], [0], [0], [1], [0, 0, 1, 1], [], []>} : vector<16x8xf32>, vector<8x128xf32>, vector<16x128xf32> -> vector<16x128xf32>
    %c0_3 = arith.constant 0 : index
    %c0_4 = arith.constant 0 : index
    %3 = vector.load %arg2[%c0_3, %c0_4] : memref<16x8xf32, #tpu.memory_space<vmem>>, vector<16x8xf32>
    %c0_5 = arith.constant 0 : index
    %c0_6 = arith.constant 0 : index
    %4 = vector.load %arg4[%c0_5, %c0_6] : memref<8x128xf32, #tpu.memory_space<vmem>>, vector<8x128xf32>
    %cst_7 = arith.constant dense<0.000000e+00> : vector<16x128xf32>
    %5 = tpu.matmul %3, %4, %cst_7 {dimension_numbers = #tpu.dot_dimension_numbers<[1], [0], [0], [1], [0, 0, 1, 1], [], []>} : vector<16x8xf32>, vector<8x128xf32>, vector<16x128xf32> -> vector<16x128xf32>
    %6 = arith.addf %2, %5 : vector<16x128xf32>
    %c0_8 = arith.constant 0 : index
    %c0_9 = arith.constant 0 : index
    %7 = vector.load %arg5[%c0_8, %c0_9] : memref<1x128xf32, #tpu.memory_space<vmem>>, vector<1x128xf32>
    %8 = vector.broadcast %7 : vector<1x128xf32> to vector<16x128xf32>
    %9 = arith.addf %6, %8 : vector<16x128xf32>
    %cst_10 = arith.constant 0.000000e+00 : f32
    %10 = vector.broadcast %cst_10 : f32 to vector<16x128xf32>
    %11 = arith.maximumf %9, %10 : vector<16x128xf32>
    %c0_11 = arith.constant 0 : index
    %c0_12 = arith.constant 0 : index
    %12 = vector.load %arg6[%c0_11, %c0_12] : memref<128x128xf32, #tpu.memory_space<vmem>>, vector<128x128xf32>
    %cst_13 = arith.constant dense<0.000000e+00> : vector<16x128xf32>
    %13 = tpu.matmul %11, %12, %cst_13 {dimension_numbers = #tpu.dot_dimension_numbers<[1], [0], [0], [1], [0, 0, 1, 1], [], []>} : vector<16x128xf32>, vector<128x128xf32>, vector<16x128xf32> -> vector<16x128xf32>
    %c0_14 = arith.constant 0 : index
    %c0_15 = arith.constant 0 : index
    %14 = vector.load %arg7[%c0_14, %c0_15] : memref<1x128xf32, #tpu.memory_space<vmem>>, vector<1x128xf32>
    %15 = vector.broadcast %14 : vector<1x128xf32> to vector<16x128xf32>
    %16 = arith.addf %13, %15 : vector<16x128xf32>
    %cst_16 = arith.constant 0.000000e+00 : f32
    %17 = vector.broadcast %cst_16 : f32 to vector<16x128xf32>
    %18 = arith.maximumf %16, %17 : vector<16x128xf32>
    %c0_17 = arith.constant 0 : index
    %c0_18 = arith.constant 0 : index
    %19 = vector.load %arg8[%c0_17, %c0_18] : memref<128x128xf32, #tpu.memory_space<vmem>>, vector<128x128xf32>
    %cst_19 = arith.constant dense<0.000000e+00> : vector<16x128xf32>
    %20 = tpu.matmul %18, %19, %cst_19 {dimension_numbers = #tpu.dot_dimension_numbers<[1], [0], [0], [1], [0, 0, 1, 1], [], []>} : vector<16x128xf32>, vector<128x128xf32>, vector<16x128xf32> -> vector<16x128xf32>
    %c0_20 = arith.constant 0 : index
    %c0_21 = arith.constant 0 : index
    %21 = vector.load %arg9[%c0_20, %c0_21] : memref<1x128xf32, #tpu.memory_space<vmem>>, vector<1x128xf32>
    %22 = vector.broadcast %21 : vector<1x128xf32> to vector<16x128xf32>
    %23 = arith.addf %20, %22 : vector<16x128xf32>
    %c0_22 = arith.constant 0 : index
    %c0_23 = arith.constant 0 : index
    %24 = vector.load %arg10[%c0_22, %c0_23] : memref<16x128xf32, #tpu.memory_space<vmem>>, vector<16x128xf32>
    tpu.vector_store %arg10[%c0_22, %c0_23], %23 {strides = array<i32>} : memref<16x128xf32, #tpu.memory_space<vmem>>, vector<16x128xf32>,
    return
  }
  func.func @transform_0(%arg0: i32) -> (i32, i32) {
    %c0_i32 = arith.constant 0 : i32
    %c0_i32_0 = arith.constant 0 : i32
    return %arg0, %c0_i32 : i32, i32
  }
  func.func @transform_1(%arg0: i32) -> (i32, i32) {
    %c0_i32 = arith.constant 0 : i32
    %c0_i32_0 = arith.constant 0 : i32
    return %arg0, %c0_i32 : i32, i32
  }
  func.func @transform_2(%arg0: i32) -> (i32, i32) {
    %c0_i32 = arith.constant 0 : i32
    %c0_i32_0 = arith.constant 0 : i32
    %c0_i32_1 = arith.constant 0 : i32
    return %c0_i32, %c0_i32_0 : i32, i32
  }
  func.func @transform_3(%arg0: i32) -> (i32, i32) {
    %c0_i32 = arith.constant 0 : i32
    %c0_i32_0 = arith.constant 0 : i32
    %c0_i32_1 = arith.constant 0 : i32
    return %c0_i32, %c0_i32_0 : i32, i32
  }
  func.func @transform_4(%arg0: i32) -> (i32, i32) {
    %c0_i32 = arith.constant 0 : i32
    %c0_i32_0 = arith.constant 0 : i32
    %c0_i32_1 = arith.constant 0 : i32
    return %c0_i32, %c0_i32_0 : i32, i32
  }
  func.func @transform_5(%arg0: i32) -> (i32, i32) {
    %c0_i32 = arith.constant 0 : i32
    %c0_i32_0 = arith.constant 0 : i32
    %c0_i32_1 = arith.constant 0 : i32
    return %c0_i32, %c0_i32_0 : i32, i32
  }
  func.func @transform_6(%arg0: i32) -> (i32, i32) {
    %c0_i32 = arith.constant 0 : i32
    %c0_i32_0 = arith.constant 0 : i32
    %c0_i32_1 = arith.constant 0 : i32
    return %c0_i32, %c0_i32_0 : i32, i32
  }
  func.func @transform_7(%arg0: i32) -> (i32, i32) {
    %c0_i32 = arith.constant 0 : i32
    %c0_i32_0 = arith.constant 0 : i32
    %c0_i32_1 = arith.constant 0 : i32
    return %c0_i32, %c0_i32_0 : i32, i32
  }
  func.func @transform_8(%arg0: i32) -> (i32, i32) {
    %c0_i32 = arith.constant 0 : i32
    %c0_i32_0 = arith.constant 0 : i32
    %c0_i32_1 = arith.constant 0 : i32
    return %c0_i32, %c0_i32_0 : i32, i32
  }
  func.func @transform_9(%arg0: i32) -> (i32, i32) {
    %c0_i32 = arith.constant 0 : i32
    %c0_i32_0 = arith.constant 0 : i32
    return %arg0, %c0_i32 : i32, i32
  }
}

</mosaic_0001>

<llo_original>
// kernel: tpu_custom_call.1
$region0: #{tpu_custom_call.1}
  #allocation0 [shape = 'u32[]', space=smem, size = 0x4, offset = 0x4, fixed_abs, tag = 'smem constant byte address 0x4 - core index']
  #allocation1 [shape = 'u32[144,128]{1,0:T(1,128)}', space=vmem, size = 0x12000, scoped, tag = 'internal scratch']
  %s0 = inlined_call_operand.vmem [shape: f32[16,8], index: 0, kind: input, shape index: {}]
  %s1 = inlined_call_operand.vmem [shape: f32[16,8], index: 1, kind: input, shape index: {}]
  %s2 = inlined_call_operand.vmem [shape: f32[8,128], index: 2, kind: input, shape index: {}]
  %s3 = inlined_call_operand.vmem [shape: f32[8,128], index: 3, kind: input, shape index: {}]
  %s4 = inlined_call_operand.vmem [shape: f32[1,128], index: 4, kind: input, shape index: {}]
  %s5 = inlined_call_operand.hbm [shape: f32[128,128], index: 5, kind: input, shape index: {}]
  %s6 = inlined_call_operand.vmem [shape: f32[1,128], index: 6, kind: input, shape index: {}]
  %s7 = inlined_call_operand.hbm [shape: f32[128,128], index: 7, kind: input, shape index: {}]
  %s8 = inlined_call_operand.vmem [shape: f32[1,128], index: 8, kind: input, shape index: {}]
  %s9 = inlined_call_operand.hbm [shape: f32[16,128], index: 9, kind: output, shape index: {}]
  %s10 = sld [smem:[#allocation0]]
  $region54: #{tpu_custom_call.1} parent=0
    _
  %s12 = ssub.s32 1, %s10
  %s13 = scalar_select 0, %s12, %s10
  $region1: #{tpu_custom_call.1} parent=0
    #allocation2 [shape = 'u8[65536]{0}', space=vmem, size = 0x10000, scoped, tag = 'input window, operand 5, single buffered']
    #allocation3 [shape = 's32[1]{0}', space=sflag, size = 0x4, scoped, tag = 'scoped memory for tpu_custom_call.1']
    #allocation4 [shape = 's32[1]{0}', space=sflag, size = 0x4, scoped, tag = 'scoped memory for tpu_custom_call.1']
    #allocation5 [shape = 'u8[65536]{0}', space=vmem, size = 0x10000, scoped, tag = 'input window, operand 7, single buffered']
    #allocation6 [shape = 's32[1]{0}', space=sflag, size = 0x4, scoped, tag = 'scoped memory for tpu_custom_call.1']
    #allocation7 [shape = 'u8[8192]{0}', space=vmem, size = 0x2000, scoped, tag = 'output window, operand 0, single buffered']
    %14 = vsyncpa [#allocation3], 0
    %15 = vsyncpa [#allocation6], 0
    %16 = vsyncpa [#allocation4], 0
    // Predicated region
    $region2: #{tpu_custom_call.1} parent=1 // pred_check
      _
    $region3: #{tpu_custom_call.1} parent=1 // pred_check_branch
      %18 = sbr.rel (0) target = $region5
    $region4: #{tpu_custom_call.1} parent=1 // pred_region
      _
    $region5: #{tpu_custom_call.1} parent=1 // pred_fallthru
      _
    // Predicated region
    $region6: #{tpu_custom_call.1} parent=1 // pred_check
      _
    $region7: #{tpu_custom_call.1} parent=1 // pred_check_branch
      %20 = sbr.rel (0) target = $region9
    $region8: #{tpu_custom_call.1} parent=1 // pred_region
      _
    $region9: #{tpu_custom_call.1} parent=1 // pred_fallthru
      _
    // Predicated region
    $region10: #{tpu_custom_call.1} parent=1 // pred_check
      _
    $region11: #{tpu_custom_call.1} parent=1 // pred_check_branch
      %22 = sbr.rel (0) target = $region13
    $region12: #{tpu_custom_call.1} parent=1 // pred_region
      _
    $region13: #{tpu_custom_call.1} parent=1 // pred_fallthru
      _
    // Predicated region
    $region14: #{tpu_custom_call.1} parent=1 // pred_check
      _
    $region15: #{tpu_custom_call.1} parent=1 // pred_check_branch
      %24 = sbr.rel (0) target = $region17
    $region16: #{tpu_custom_call.1} parent=1 // pred_region
      _
    $region17: #{tpu_custom_call.1} parent=1 // pred_fallthru
      _
    // Predicated region
    $region18: #{tpu_custom_call.1} parent=1 // pred_check
      _
    $region19: #{tpu_custom_call.1} parent=1 // pred_check_branch
      %26 = sbr.rel (0) target = $region21
    $region20: #{tpu_custom_call.1} parent=1 // pred_region
      _
    $region21: #{tpu_custom_call.1} parent=1 // pred_fallthru
      _
    // Predicated region
    $region22: #{tpu_custom_call.1} parent=1 // pred_check
      _
    $region23: #{tpu_custom_call.1} parent=1 // pred_check_branch
      %28 = sbr.rel (0) target = $region25
    $region24: #{tpu_custom_call.1} parent=1 // pred_region
      %s30 = ssub.s32 2048, 2048
      %31 = vsyncadd [#allocation3], %s30
      %s32 = sshll.u32 [#allocation2], 4
      %s33 = int_to_ptr.vmem [resolvable:$true] %s32
      %38 = dma.hbm_to_vmem [thread:$0]  %s5, 2048, %s33, [#allocation3], 128, 128, 8
    $region25: #{tpu_custom_call.1} parent=1 // pred_fallthru
      _
    // Predicated region
    $region26: #{tpu_custom_call.1} parent=1 // pred_check
      _
    $region27: #{tpu_custom_call.1} parent=1 // pred_check_branch
      %40 = sbr.rel (0) target = $region29
    $region28: #{tpu_custom_call.1} parent=1 // pred_region
      _
    $region29: #{tpu_custom_call.1} parent=1 // pred_fallthru
      _
    // Predicated region
    $region30: #{tpu_custom_call.1} parent=1 // pred_check
      _
    $region31: #{tpu_custom_call.1} parent=1 // pred_check_branch
      %42 = sbr.rel (0) target = $region33
    $region32: #{tpu_custom_call.1} parent=1 // pred_region
      %s44 = ssub.s32 2048, 2048
      %45 = vsyncadd [#allocation6], %s44
      %s46 = sshll.u32 [#allocation5], 4
      %s47 = int_to_ptr.vmem [resolvable:$true] %s46
      %52 = dma.hbm_to_vmem [thread:$0]  %s7, 2048, %s47, [#allocation6], 128, 128, 8
    $region33: #{tpu_custom_call.1} parent=1 // pred_fallthru
      _
    // Predicated region
    $region34: #{tpu_custom_call.1} parent=1 // pred_check
      _
    $region35: #{tpu_custom_call.1} parent=1 // pred_check_branch
      %54 = sbr.rel (0) target = $region37
    $region36: #{tpu_custom_call.1} parent=1 // pred_region
      _
    $region37: #{tpu_custom_call.1} parent=1 // pred_fallthru
      _
    // Predicated region
    $region38: #{tpu_custom_call.1} parent=1 // pred_check
      _
    $region39: #{tpu_custom_call.1} parent=1 // pred_check_branch
      %56 = sbr.rel (0) target = $region41
    $region40: #{tpu_custom_call.1} parent=1 // pred_region
      %57 = dma.done [#allocation3], 2048
    $region41: #{tpu_custom_call.1} parent=1 // pred_fallthru
      _
    // Predicated region
    $region42: #{tpu_custom_call.1} parent=1 // pred_check
      _
    $region43: #{tpu_custom_call.1} parent=1 // pred_check_branch
      %59 = sbr.rel (0) target = $region45
    $region44: #{tpu_custom_call.1} parent=1 // pred_region
      %60 = dma.done [#allocation6], 2048
    $region45: #{tpu_custom_call.1} parent=1 // pred_fallthru
      _
    %v61 = vld [vmem:[%s0] sm:$0xff]
    %v62 = vld [vmem:[%s0 + $0x8] sm:$0xff]
    %v63 = vld [vmem:[%s2] sm:$0xff]
    %v64 = vld [vmem:[%s1] sm:$0xff]
    %v65 = vld [vmem:[%s1 + $0x8] sm:$0xff]
    %v66 = vld [vmem:[%s3] sm:$0xff]
    %vm67 = vcmask 64512
    %v69 = vsel %vm67, %v64, 0
    %v72 = vsel %vm67, %v65, 0
    %74 = vmatprep.subr.mxu0 0.0
    %75 = vmatpush1.msra.mxu0 %v66
    %76 = vmatprep.subr.mxu0 0.0
    %77 = vmatpush1.msra.mxu0 0.0
    %78 = vmatprep.subr.mxu0 0.0
    %79 = vmatpush1.msra.mxu0 0.0
    %80 = vmatprep.subr.mxu0 0.0
    %81 = vmatpush1.msra.mxu0 0.0
    %82 = vmatprep.subr.mxu0 0.0
    %83 = vmatpush1.msra.mxu0 0.0
    %84 = vmatprep.subr.mxu0 0.0
    %85 = vmatpush1.msra.mxu0 0.0
    %86 = vmatprep.subr.mxu0 0.0
    %87 = vmatpush1.msra.mxu0 0.0
    %88 = vmatprep.subr.mxu0 0.0
    %89 = vmatpush1.msra.mxu0 0.0
    %90 = vmatprep.subr.mxu0 0.0
    %91 = vmatpush1.msra.mxu0 0.0
    %92 = vmatprep.subr.mxu0 0.0
    %93 = vmatpush1.msra.mxu0 0.0
    %94 = vmatprep.subr.mxu0 0.0
    %95 = vmatpush1.msra.mxu0 0.0
    %96 = vmatprep.subr.mxu0 0.0
    %97 = vmatpush1.msra.mxu0 0.0
    %98 = vmatprep.subr.mxu0 0.0
    %99 = vmatpush1.msra.mxu0 0.0
    %100 = vmatprep.subr.mxu0 0.0
    %101 = vmatpush1.msra.mxu0 0.0
    %102 = vmatprep.subr.mxu0 0.0
    %103 = vmatpush1.msra.mxu0 0.0
    %104 = vmatprep.subr.mxu0 0.0
    %105 = vmatpush1.msra.mxu0 0.0
    %106 = vmatprep.subr.mxu0 0.0
    %107 = vmatpush1.msra.mxu0 0.0
    %108 = vmatprep.subr.mxu0 0.0
    %109 = vmatpush1.msra.mxu0 0.0
    %110 = vmatprep.subr.mxu0 0.0
    %111 = vmatpush1.msra.mxu0 0.0
    %112 = vmatprep.subr.mxu0 0.0
    %113 = vmatpush1.msra.mxu0 0.0
    %114 = vmatprep.subr.mxu0 0.0
    %115 = vmatpush1.msra.mxu0 0.0
    %116 = vmatprep.subr.mxu0 0.0
    %117 = vmatpush1.msra.mxu0 0.0
    %118 = vmatprep.subr.mxu0 0.0
    %119 = vmatpush1.msra.mxu0 0.0
    %120 = vmatprep.subr.mxu0 0.0
    %121 = vmatpush1.msra.mxu0 0.0
    %122 = vmatprep.subr.mxu0 0.0
    %123 = vmatpush1.msra.mxu0 0.0
    %124 = vmatprep.subr.mxu0 0.0
    %125 = vmatpush1.msra.mxu0 0.0
    %126 = vmatprep.subr.mxu0 0.0
    %127 = vmatpush1.msra.mxu0 0.0
    %128 = vmatprep.subr.mxu0 0.0
    %129 = vmatpush1.msra.mxu0 0.0
    %130 = vmatprep.subr.mxu0 0.0
    %131 = vmatpush1.msra.mxu0 0.0
    %132 = vmatprep.subr.mxu0 0.0
    %133 = vmatpush1.msra.mxu0 0.0
    %134 = vmatprep.subr.mxu0 0.0
    %135 = vmatpush1.msra.mxu0 0.0
    %136 = vmatprep.subr.mxu0 0.0
    %137 = vmatpush1.msra.mxu0 0.0
    %138 = vmatprep.mubr.f32.mxu0 0.0
    %139 = vmatmul.mubr.f32.gmra.mrb[0].mxu0 %v69
    %v140 = vpop.f32.mrb[0].mxu0
    %v141 = vadd.f32 0.0, %v140
    %v142 = vpop.f32.mrb[0].mxu0
    %143 = vmatprep.mubr.f32.mxu0 0.0
    %144 = vmatmul.mubr.f32.gmra.mrb[0].mxu0 %v72
    %v145 = vpop.f32.mrb[0].mxu0
    %v146 = vadd.f32 0.0, %v145
    %v147 = vpop.f32.mrb[0].mxu0
    %148 = vdwg.mxu0
    %v150 = vsel %vm67, %v61, 0
    %v153 = vsel %vm67, %v62, 0
    %155 = vmatprep.subr.mxu0 0.0
    %156 = vmatpush1.msra.mxu0 %v63
    %157 = vmatprep.subr.mxu0 0.0
    %158 = vmatpush1.msra.mxu0 0.0
    %159 = vmatprep.subr.mxu0 0.0
    %160 = vmatpush1.msra.mxu0 0.0
    %161 = vmatprep.subr.mxu0 0.0
    %162 = vmatpush1.msra.mxu0 0.0
    %163 = vmatprep.subr.mxu0 0.0
    %164 = vmatpush1.msra.mxu0 0.0
    %165 = vmatprep.subr.mxu0 0.0
    %166 = vmatpush1.msra.mxu0 0.0
    %167 = vmatprep.subr.mxu0 0.0
    %168 = vmatpush1.msra.mxu0 0.0
    %169 = vmatprep.subr.mxu0 0.0
    %170 = vmatpush1.msra.mxu0 0.0
    %171 = vmatprep.subr.mxu0 0.0
    %172 = vmatpush1.msra.mxu0 0.0
    %173 = vmatprep.subr.mxu0 0.0
    %174 = vmatpush1.msra.mxu0 0.0
    %175 = vmatprep.subr.mxu0 0.0
    %176 = vmatpush1.msra.mxu0 0.0
    %177 = vmatprep.subr.mxu0 0.0
    %178 = vmatpush1.msra.mxu0 0.0
    %179 = vmatprep.subr.mxu0 0.0
    %180 = vmatpush1.msra.mxu0 0.0
    %181 = vmatprep.subr.mxu0 0.0
    %182 = vmatpush1.msra.mxu0 0.0
    %183 = vmatprep.subr.mxu0 0.0
    %184 = vmatpush1.msra.mxu0 0.0
    %185 = vmatprep.subr.mxu0 0.0
    %186 = vmatpush1.msra.mxu0 0.0
    %187 = vmatprep.subr.mxu0 0.0
    %188 = vmatpush1.msra.mxu0 0.0
    %189 = vmatprep.subr.mxu0 0.0
    %190 = vmatpush1.msra.mxu0 0.0
    %191 = vmatprep.subr.mxu0 0.0
    %192 = vmatpush1.msra.mxu0 0.0
    %193 = vmatprep.subr.mxu0 0.0
    %194 = vmatpush1.msra.mxu0 0.0
    %195 = vmatprep.subr.mxu0 0.0
    %196 = vmatpush1.msra.mxu0 0.0
    %197 = vmatprep.subr.mxu0 0.0
    %198 = vmatpush1.msra.mxu0 0.0
    %199 = vmatprep.subr.mxu0 0.0
    %200 = vmatpush1.msra.mxu0 0.0
    %201 = vmatprep.subr.mxu0 0.0
    %202 = vmatpush1.msra.mxu0 0.0
    %203 = vmatprep.subr.mxu0 0.0
    %204 = vmatpush1.msra.mxu0 0.0
    %205 = vmatprep.subr.mxu0 0.0
    %206 = vmatpush1.msra.mxu0 0.0
    %207 = vmatprep.subr.mxu0 0.0
    %208 = vmatpush1.msra.mxu0 0.0
    %209 = vmatprep.subr.mxu0 0.0
    %210 = vmatpush1.msra.mxu0 0.0
    %211 = vmatprep.subr.mxu0 0.0
    %212 = vmatpush1.msra.mxu0 0.0
    %213 = vmatprep.subr.mxu0 0.0
    %214 = vmatpush1.msra.mxu0 0.0
    %215 = vmatprep.subr.mxu0 0.0
    %216 = vmatpush1.msra.mxu0 0.0
    %217 = vmatprep.subr.mxu0 0.0
    %218 = vmatpush1.msra.mxu0 0.0
    %219 = vmatprep.mubr.f32.mxu0 0.0
    %220 = vmatmul.mubr.f32.gmra.mrb[0].mxu0 %v150
    %v221 = vpop.f32.mrb[0].mxu0
    %v222 = vadd.f32 %v141, %v221
    %v223 = vpop.f32.mrb[0].mxu0
    %224 = vmatprep.mubr.f32.mxu0 0.0
    %225 = vmatmul.mubr.f32.gmra.mrb[0].mxu0 %v153
    %v226 = vpop.f32.mrb[0].mxu0
    %v227 = vadd.f32 %v146, %v226
    %v228 = vpop.f32.mrb[0].mxu0
    %229 = vdwg.mxu0
    %v230 = vld [vmem:[%s4] sm:$0x1]
    %v232 = vlaneseq
    %v233 = vshrl.u32 %v232, 7
    %v234 = vsub.s32 0, %v233
    %v235 = vrot.slane %v230, %v234
    %v237 = vadd.f32 %v222, %v235
    %v238 = vadd.f32 %v227, %v235
    %v239 = vmax.f32 %v237, 0.0
    %v240 = vmax.f32 %v238, 0.0
    %v241 = vld [vmem:[#allocation2] sm:$0xff]
    %v242 = vld [vmem:[#allocation2 + $0x8] sm:$0xff]
    %v243 = vld [vmem:[#allocation2 + $0x10] sm:$0xff]
    %v244 = vld [vmem:[#allocation2 + $0x18] sm:$0xff]
    %v245 = vld [vmem:[#allocation2 + $0x20] sm:$0xff]
    %v246 = vld [vmem:[#allocation2 + $0x28] sm:$0xff]
    %v247 = vld [vmem:[#allocation2 + $0x30] sm:$0xff]
    %v248 = vld [vmem:[#allocation2 + $0x38] sm:$0xff]
    %v249 = vld [vmem:[#allocation2 + $0x40] sm:$0xff]
    %v250 = vld [vmem:[#allocation2 + $0x48] sm:$0xff]
    %v251 = vld [vmem:[#allocation2 + $0x50] sm:$0xff]
    %v252 = vld [vmem:[#allocation2 + $0x58] sm:$0xff]
    %v253 = vld [vmem:[#allocation2 + $0x60] sm:$0xff]
    %v254 = vld [vmem:[#allocation2 + $0x68] sm:$0xff]
    %v255 = vld [vmem:[#allocation2 + $0x70] sm:$0xff]
    %v256 = vld [vmem:[#allocation2 + $0x78] sm:$0xff]
    %v257 = vld [vmem:[%s6] sm:$0x1]
    %v259 = vlaneseq
    %v260 = vshrl.u32 %v259, 7
    %v261 = vsub.s32 0, %v260
    %v262 = vrot.slane %v257, %v261
    %264 = vmatprep.subr.mxu0 0.0
    %265 = vmatpush1.msra.mxu0 %v241
    %266 = vmatprep.subr.mxu0 0.0
    %267 = vmatpush1.msra.mxu0 %v242
    %268 = vmatprep.subr.mxu0 0.0
    %269 = vmatpush1.msra.mxu0 %v243
    %270 = vmatprep.subr.mxu0 0.0
    %271 = vmatpush1.msra.mxu0 %v244
    %272 = vmatprep.subr.mxu0 0.0
    %273 = vmatpush1.msra.mxu0 %v245
    %274 = vmatprep.subr.mxu0 0.0
    %275 = vmatpush1.msra.mxu0 %v246
    %276 = vmatprep.subr.mxu0 0.0
    %277 = vmatpush1.msra.mxu0 %v247
    %278 = vmatprep.subr.mxu0 0.0
    %279 = vmatpush1.msra.mxu0 %v248
    %280 = vmatprep.subr.mxu0 0.0
    %281 = vmatpush1.msra.mxu0 %v249
    %282 = vmatprep.subr.mxu0 0.0
    %283 = vmatpush1.msra.mxu0 %v250
    %284 = vmatprep.subr.mxu0 0.0
    %285 = vmatpush1.msra.mxu0 %v251
    %286 = vmatprep.subr.mxu0 0.0
    %287 = vmatpush1.msra.mxu0 %v252
    %288 = vmatprep.subr.mxu0 0.0
    %289 = vmatpush1.msra.mxu0 %v253
    %290 = vmatprep.subr.mxu0 0.0
    %291 = vmatpush1.msra.mxu0 %v254
    %292 = vmatprep.subr.mxu0 0.0
    %293 = vmatpush1.msra.mxu0 %v255
    %294 = vmatprep.subr.mxu0 0.0
    %295 = vmatpush1.msra.mxu0 %v256
    %296 = vmatprep.subr.mxu0 0.0
    %297 = vmatpush1.msra.mxu0 0.0
    %298 = vmatprep.subr.mxu0 0.0
    %299 = vmatpush1.msra.mxu0 0.0
    %300 = vmatprep.subr.mxu0 0.0
    %301 = vmatpush1.msra.mxu0 0.0
    %302 = vmatprep.subr.mxu0 0.0
    %303 = vmatpush1.msra.mxu0 0.0
    %304 = vmatprep.subr.mxu0 0.0
    %305 = vmatpush1.msra.mxu0 0.0
    %306 = vmatprep.subr.mxu0 0.0
    %307 = vmatpush1.msra.mxu0 0.0
    %308 = vmatprep.subr.mxu0 0.0
    %309 = vmatpush1.msra.mxu0 0.0
    %310 = vmatprep.subr.mxu0 0.0
    %311 = vmatpush1.msra.mxu0 0.0
    %312 = vmatprep.subr.mxu0 0.0
    %313 = vmatpush1.msra.mxu0 0.0
    %314 = vmatprep.subr.mxu0 0.0
    %315 = vmatpush1.msra.mxu0 0.0
    %316 = vmatprep.subr.mxu0 0.0
    %317 = vmatpush1.msra.mxu0 0.0
    %318 = vmatprep.subr.mxu0 0.0
    %319 = vmatpush1.msra.mxu0 0.0
    %320 = vmatprep.subr.mxu0 0.0
    %321 = vmatpush1.msra.mxu0 0.0
    %322 = vmatprep.subr.mxu0 0.0
    %323 = vmatpush1.msra.mxu0 0.0
    %324 = vmatprep.subr.mxu0 0.0
    %325 = vmatpush1.msra.mxu0 0.0
    %326 = vmatprep.subr.mxu0 0.0
    %327 = vmatpush1.msra.mxu0 0.0
    %328 = vmatprep.mubr.f32.mxu0 0.0
    %329 = vmatmul.mubr.f32.gmra.mrb[0].mxu0 %v239
    %v330 = vpop.f32.mrb[0].mxu0
    %v331 = vadd.f32 %v262, %v330
    %v332 = vpop.f32.mrb[0].mxu0
    %333 = vmatprep.mubr.f32.mxu0 0.0
    %334 = vmatmul.mubr.f32.gmra.mrb[0].mxu0 %v240
    %v335 = vpop.f32.mrb[0].mxu0
    %v336 = vadd.f32 %v262, %v335
    %v337 = vpop.f32.mrb[0].mxu0
    %338 = vdwg.mxu0
    %v339 = vmax.f32 %v331, 0.0
    %v340 = vmax.f32 %v336, 0.0
    %v341 = vld [vmem:[#allocation5] sm:$0xff]
    %v342 = vld [vmem:[#allocation5 + $0x8] sm:$0xff]
    %v343 = vld [vmem:[#allocation5 + $0x10] sm:$0xff]
    %v344 = vld [vmem:[#allocation5 + $0x18] sm:$0xff]
    %v345 = vld [vmem:[#allocation5 + $0x20] sm:$0xff]
    %v346 = vld [vmem:[#allocation5 + $0x28] sm:$0xff]
    %v347 = vld [vmem:[#allocation5 + $0x30] sm:$0xff]
    %v348 = vld [vmem:[#allocation5 + $0x38] sm:$0xff]
    %v349 = vld [vmem:[#allocation5 + $0x40] sm:$0xff]
    %v350 = vld [vmem:[#allocation5 + $0x48] sm:$0xff]
    %v351 = vld [vmem:[#allocation5 + $0x50] sm:$0xff]
    %v352 = vld [vmem:[#allocation5 + $0x58] sm:$0xff]
    %v353 = vld [vmem:[#allocation5 + $0x60] sm:$0xff]
    %v354 = vld [vmem:[#allocation5 + $0x68] sm:$0xff]
    %v355 = vld [vmem:[#allocation5 + $0x70] sm:$0xff]
    %v356 = vld [vmem:[#allocation5 + $0x78] sm:$0xff]
    %v357 = vld [vmem:[%s8] sm:$0x1]
    %v359 = vlaneseq
    %v360 = vshrl.u32 %v359, 7
    %v361 = vsub.s32 0, %v360
    %v362 = vrot.slane %v357, %v361
    %364 = vmatprep.subr.mxu0 0.0
    %365 = vmatpush1.msra.mxu0 %v341
    %366 = vmatprep.subr.mxu0 0.0
    %367 = vmatpush1.msra.mxu0 %v342
    %368 = vmatprep.subr.mxu0 0.0
    %369 = vmatpush1.msra.mxu0 %v343
    %370 = vmatprep.subr.mxu0 0.0
    %371 = vmatpush1.msra.mxu0 %v344
    %372 = vmatprep.subr.mxu0 0.0
    %373 = vmatpush1.msra.mxu0 %v345
    %374 = vmatprep.subr.mxu0 0.0
    %375 = vmatpush1.msra.mxu0 %v346
    %376 = vmatprep.subr.mxu0 0.0
    %377 = vmatpush1.msra.mxu0 %v347
    %378 = vmatprep.subr.mxu0 0.0
    %379 = vmatpush1.msra.mxu0 %v348
    %380 = vmatprep.subr.mxu0 0.0
    %381 = vmatpush1.msra.mxu0 %v349
    %382 = vmatprep.subr.mxu0 0.0
    %383 = vmatpush1.msra.mxu0 %v350
    %384 = vmatprep.subr.mxu0 0.0
    %385 = vmatpush1.msra.mxu0 %v351
    %386 = vmatprep.subr.mxu0 0.0
    %387 = vmatpush1.msra.mxu0 %v352
    %388 = vmatprep.subr.mxu0 0.0
    %389 = vmatpush1.msra.mxu0 %v353
    %390 = vmatprep.subr.mxu0 0.0
    %391 = vmatpush1.msra.mxu0 %v354
    %392 = vmatprep.subr.mxu0 0.0
    %393 = vmatpush1.msra.mxu0 %v355
    %394 = vmatprep.subr.mxu0 0.0
    %395 = vmatpush1.msra.mxu0 %v356
    %396 = vmatprep.subr.mxu0 0.0
    %397 = vmatpush1.msra.mxu0 0.0
    %398 = vmatprep.subr.mxu0 0.0
    %399 = vmatpush1.msra.mxu0 0.0
    %400 = vmatprep.subr.mxu0 0.0
    %401 = vmatpush1.msra.mxu0 0.0
    %402 = vmatprep.subr.mxu0 0.0
    %403 = vmatpush1.msra.mxu0 0.0
    %404 = vmatprep.subr.mxu0 0.0
    %405 = vmatpush1.msra.mxu0 0.0
    %406 = vmatprep.subr.mxu0 0.0
    %407 = vmatpush1.msra.mxu0 0.0
    %408 = vmatprep.subr.mxu0 0.0
    %409 = vmatpush1.msra.mxu0 0.0
    %410 = vmatprep.subr.mxu0 0.0
    %411 = vmatpush1.msra.mxu0 0.0
    %412 = vmatprep.subr.mxu0 0.0
    %413 = vmatpush1.msra.mxu0 0.0
    %414 = vmatprep.subr.mxu0 0.0
    %415 = vmatpush1.msra.mxu0 0.0
    %416 = vmatprep.subr.mxu0 0.0
    %417 = vmatpush1.msra.mxu0 0.0
    %418 = vmatprep.subr.mxu0 0.0
    %419 = vmatpush1.msra.mxu0 0.0
    %420 = vmatprep.subr.mxu0 0.0
    %421 = vmatpush1.msra.mxu0 0.0
    %422 = vmatprep.subr.mxu0 0.0
    %423 = vmatpush1.msra.mxu0 0.0
    %424 = vmatprep.subr.mxu0 0.0
    %425 = vmatpush1.msra.mxu0 0.0
    %426 = vmatprep.subr.mxu0 0.0
    %427 = vmatpush1.msra.mxu0 0.0
    %428 = vmatprep.mubr.f32.mxu0 0.0
    %429 = vmatmul.mubr.f32.gmra.mrb[0].mxu0 %v339
    %v430 = vpop.f32.mrb[0].mxu0
    %v431 = vadd.f32 %v362, %v430
    %v432 = vpop.f32.mrb[0].mxu0
    %433 = vmatprep.mubr.f32.mxu0 0.0
    %434 = vmatmul.mubr.f32.gmra.mrb[0].mxu0 %v340
    %v435 = vpop.f32.mrb[0].mxu0
    %v436 = vadd.f32 %v362, %v435
    %v437 = vpop.f32.mrb[0].mxu0
    %438 = vdwg.mxu0
    %439 = vst [vmem:[#allocation7] sm:$0xff] %v431
    %440 = vst [vmem:[#allocation7 + $0x8] sm:$0xff] %v436
    // Predicated region
    $region46: #{tpu_custom_call.1} parent=1 // pred_check
      _
    $region47: #{tpu_custom_call.1} parent=1 // pred_check_branch
      %442 = sbr.rel (0) target = $region49
    $region48: #{tpu_custom_call.1} parent=1 // pred_region
      %s444 = ssub.s32 256, 256
      %445 = vsyncadd [#allocation4], %s444
      %s446 = sshll.u32 [#allocation7], 4
      %s447 = int_to_ptr.vmem [resolvable:$true] %s446
      %452 = dma.vmem_to_hbm [thread:$0]  %s447, 256, %s9, [#allocation4], 128, 128, 8
    $region49: #{tpu_custom_call.1} parent=1 // pred_fallthru
      _
    // Predicated region
    $region50: #{tpu_custom_call.1} parent=1 // pred_check
      _
    $region51: #{tpu_custom_call.1} parent=1 // pred_check_branch
      %454 = sbr.rel (0) target = $region53
    $region52: #{tpu_custom_call.1} parent=1 // pred_region
      %455 = dma.done [#allocation4], 256
    $region53: #{tpu_custom_call.1} parent=1 // pred_fallthru
      _
    %456 = vsyncpa [#allocation3], 1
    %457 = vsyncpa [#allocation6], 1
    %458 = vsyncpa [#allocation4], 1

// kernel: tpu_custom_call.1
$region0: #{tpu_custom_call.1}
  #allocation0 [shape = 'u32[]', space=smem, size = 0x4, offset = 0x4, fixed_abs, tag = 'smem constant byte address 0x4 - core index']
  #allocation1 [shape = 'u32[144,128]{1,0:T(1,128)}', space=vmem, size = 0x12000, scoped, tag = 'internal scratch']
  %s0 = inlined_call_operand.vmem [shape: f32[16,8], index: 0, kind: input, shape index: {}]
  %s1 = inlined_call_operand.vmem [shape: f32[16,8], index: 1, kind: input, shape index: {}]
  %s2 = inlined_call_operand.vmem [shape: f32[8,128], index: 2, kind: input, shape index: {}]
  %s3 = inlined_call_operand.vmem [shape: f32[8,128], index: 3, kind: input, shape index: {}]
  %s4 = inlined_call_operand.vmem [shape: f32[1,128], index: 4, kind: input, shape index: {}]
  %s5 = inlined_call_operand.hbm [shape: f32[128,128], index: 5, kind: input, shape index: {}]
  %s6 = inlined_call_operand.vmem [shape: f32[1,128], index: 6, kind: input, shape index: {}]
  %s7 = inlined_call_operand.hbm [shape: f32[128,128], index: 7, kind: input, shape index: {}]
  %s8 = inlined_call_operand.vmem [shape: f32[1,128], index: 8, kind: input, shape index: {}]
  %s9 = inlined_call_operand.hbm [shape: f32[16,128], index: 9, kind: output, shape index: {}]
  %s10 = sld [smem:[#allocation0]]
  $region54: #{tpu_custom_call.1} parent=0
    _
  %s12 = ssub.s32 1, %s10
  %s13 = scalar_select 0, %s12, %s10
  $region1: #{tpu_custom_call.1} parent=0
    #allocation2 [shape = 'u8[65536]{0}', space=vmem, size = 0x10000, scoped, tag = 'input window, operand 5, single buffered']
    #allocation3 [shape = 's32[1]{0}', space=sflag, size = 0x4, scoped, tag = 'scoped memory for tpu_custom_call.1']
    #allocation4 [shape = 's32[1]{0}', space=sflag, size = 0x4, scoped, tag = 'scoped memory for tpu_custom_call.1']
    #allocation5 [shape = 'u8[65536]{0}', space=vmem, size = 0x10000, scoped, tag = 'input window, operand 7, single buffered']
    #allocation6 [shape = 's32[1]{0}', space=sflag, size = 0x4, scoped, tag = 'scoped memory for tpu_custom_call.1']
    #allocation7 [shape = 'u8[8192]{0}', space=vmem, size = 0x2000, scoped, tag = 'output window, operand 0, single buffered']
    %14 = vsyncpa [#allocation3], 0
    %15 = vsyncpa [#allocation6], 0
    %16 = vsyncpa [#allocation4], 0
    // Predicated region
    $region2: #{tpu_custom_call.1} parent=1 // pred_check
      _
    $region3: #{tpu_custom_call.1} parent=1 // pred_check_branch
      %18 = sbr.rel (0) target = $region5
    $region4: #{tpu_custom_call.1} parent=1 // pred_region
      _
    $region5: #{tpu_custom_call.1} parent=1 // pred_fallthru
      _
    // Predicated region
    $region6: #{tpu_custom_call.1} parent=1 // pred_check
      _
    $region7: #{tpu_custom_call.1} parent=1 // pred_check_branch
      %20 = sbr.rel (0) target = $region9
    $region8: #{tpu_custom_call.1} parent=1 // pred_region
      _
    $region9: #{tpu_custom_call.1} parent=1 // pred_fallthru
      _
    // Predicated region
    $region10: #{tpu_custom_call.1} parent=1 // pred_check
      _
    $region11: #{tpu_custom_call.1} parent=1 // pred_check_branch
      %22 = sbr.rel (0) target = $region13
    $region12: #{tpu_custom_call.1} parent=1 // pred_region
      _
    $region13: #{tpu_custom_call.1} parent=1 // pred_fallthru
      _
    // Predicated region
    $region14: #{tpu_custom_call.1} parent=1 // pred_check
      _
    $region15: #{tpu_custom_call.1} parent=1 // pred_check_branch
      %24 = sbr.rel (0) target = $region17
    $region16: #{tpu_custom_call.1} parent=1 // pred_region
      _
    $region17: #{tpu_custom_call.1} parent=1 // pred_fallthru
      _
    // Predicated region
    $region18: #{tpu_custom_call.1} parent=1 // pred_check
      _
    $region19: #{tpu_custom_call.1} parent=1 // pred_check_branch
      %26 = sbr.rel (0) target = $region21
    $region20: #{tpu_custom_call.1} parent=1 // pred_region
      _
    $region21: #{tpu_custom_call.1} parent=1 // pred_fallthru
      _
    // Predicated region
    $region22: #{tpu_custom_call.1} parent=1 // pred_check
      _
    $region23: #{tpu_custom_call.1} parent=1 // pred_check_branch
      %28 = sbr.rel (0) target = $region25
    $region24: #{tpu_custom_call.1} parent=1 // pred_region
      %s30 = ssub.s32 2048, 2048
      %31 = vsyncadd [#allocation3], %s30
      %s32 = sshll.u32 [#allocation2], 4
      %s33 = int_to_ptr.vmem [resolvable:$true] %s32
      %38 = dma.hbm_to_vmem [thread:$0]  %s5, 2048, %s33, [#allocation3], 128, 128, 8
    $region25: #{tpu_custom_call.1} parent=1 // pred_fallthru
      _
    // Predicated region
    $region26: #{tpu_custom_call.1} parent=1 // pred_check
      _
    $region27: #{tpu_custom_call.1} parent=1 // pred_check_branch
      %40 = sbr.rel (0) target = $region29
    $region28: #{tpu_custom_call.1} parent=1 // pred_region
      _
    $region29: #{tpu_custom_call.1} parent=1 // pred_fallthru
      _
    // Predicated region
    $region30: #{tpu_custom_call.1} parent=1 // pred_check
      _
    $region31: #{tpu_custom_call.1} parent=1 // pred_check_branch
      %42 = sbr.rel (0) target = $region33
    $region32: #{tpu_custom_call.1} parent=1 // pred_region
      %s44 = ssub.s32 2048, 2048
      %45 = vsyncadd [#allocation6], %s44
      %s46 = sshll.u32 [#allocation5], 4
      %s47 = int_to_ptr.vmem [resolvable:$true] %s46
      %52 = dma.hbm_to_vmem [thread:$0]  %s7, 2048, %s47, [#allocation6], 128, 128, 8
    $region33: #{tpu_custom_call.1} parent=1 // pred_fallthru
      _
    // Predicated region
    $region34: #{tpu_custom_call.1} parent=1 // pred_check
      _
    $region35: #{tpu_custom_call.1} parent=1 // pred_check_branch
      %54 = sbr.rel (0) target = $region37
    $region36: #{tpu_custom_call.1} parent=1 // pred_region
      _
    $region37: #{tpu_custom_call.1} parent=1 // pred_fallthru
      _
    // Predicated region
    $region38: #{tpu_custom_call.1} parent=1 // pred_check
      _
    $region39: #{tpu_custom_call.1} parent=1 // pred_check_branch
      %56 = sbr.rel (0) target = $region41
    $region40: #{tpu_custom_call.1} parent=1 // pred_region
      %57 = dma.done [#allocation3], 2048
    $region41: #{tpu_custom_call.1} parent=1 // pred_fallthru
      _
    // Predicated region
    $region42: #{tpu_custom_call.1} parent=1 // pred_check
      _
    $region43: #{tpu_custom_call.1} parent=1 // pred_check_branch
      %59 = sbr.rel (0) target = $region45
    $region44: #{tpu_custom_call.1} parent=1 // pred_region
      %60 = dma.done [#allocation6], 2048
    $region45: #{tpu_custom_call.1} parent=1 // pred_fallthru
      _
    %v61 = vld [vmem:[%s0] sm:$0xff]
    %v62 = vld [vmem:[%s0 + $0x8] sm:$0xff]
    %v63 = vld [vmem:[%s2] sm:$0xff]
    %v64 = vld [vmem:[%s1] sm:$0xff]
    %v65 = vld [vmem:[%s1 + $0x8] sm:$0xff]
    %v66 = vld [vmem:[%s3] sm:$0xff]
    %vm67 = vcmask 64512
    %v69 = vsel %vm67, %v64, 0
    %v72 = vsel %vm67, %v65, 0
    %74 = vmatprep.subr.mxu0 0.0
    %75 = vmatpush1.msra.mxu0 %v66
    %76 = vmatprep.subr.mxu0 0.0
    %77 = vmatpush1.msra.mxu0 0.0
    %78 = vmatprep.subr.mxu0 0.0
    %79 = vmatpush1.msra.mxu0 0.0
    %80 = vmatprep.subr.mxu0 0.0
    %81 = vmatpush1.msra.mxu0 0.0
    %82 = vmatprep.subr.mxu0 0.0
    %83 = vmatpush1.msra.mxu0 0.0
    %84 = vmatprep.subr.mxu0 0.0
    %85 = vmatpush1.msra.mxu0 0.0
    %86 = vmatprep.subr.mxu0 0.0
    %87 = vmatpush1.msra.mxu0 0.0
    %88 = vmatprep.subr.mxu0 0.0
    %89 = vmatpush1.msra.mxu0 0.0
    %90 = vmatprep.subr.mxu0 0.0
    %91 = vmatpush1.msra.mxu0 0.0
    %92 = vmatprep.subr.mxu0 0.0
    %93 = vmatpush1.msra.mxu0 0.0
    %94 = vmatprep.subr.mxu0 0.0
    %95 = vmatpush1.msra.mxu0 0.0
    %96 = vmatprep.subr.mxu0 0.0
    %97 = vmatpush1.msra.mxu0 0.0
    %98 = vmatprep.subr.mxu0 0.0
    %99 = vmatpush1.msra.mxu0 0.0
    %100 = vmatprep.subr.mxu0 0.0
    %101 = vmatpush1.msra.mxu0 0.0
    %102 = vmatprep.subr.mxu0 0.0
    %103 = vmatpush1.msra.mxu0 0.0
    %104 = vmatprep.subr.mxu0 0.0
    %105 = vmatpush1.msra.mxu0 0.0
    %106 = vmatprep.subr.mxu0 0.0
    %107 = vmatpush1.msra.mxu0 0.0
    %108 = vmatprep.subr.mxu0 0.0
    %109 = vmatpush1.msra.mxu0 0.0
    %110 = vmatprep.subr.mxu0 0.0
    %111 = vmatpush1.msra.mxu0 0.0
    %112 = vmatprep.subr.mxu0 0.0
    %113 = vmatpush1.msra.mxu0 0.0
    %114 = vmatprep.subr.mxu0 0.0
    %115 = vmatpush1.msra.mxu0 0.0
    %116 = vmatprep.subr.mxu0 0.0
    %117 = vmatpush1.msra.mxu0 0.0
    %118 = vmatprep.subr.mxu0 0.0
    %119 = vmatpush1.msra.mxu0 0.0
    %120 = vmatprep.subr.mxu0 0.0
    %121 = vmatpush1.msra.mxu0 0.0
    %122 = vmatprep.subr.mxu0 0.0
    %123 = vmatpush1.msra.mxu0 0.0
    %124 = vmatprep.subr.mxu0 0.0
    %125 = vmatpush1.msra.mxu0 0.0
    %126 = vmatprep.subr.mxu0 0.0
    %127 = vmatpush1.msra.mxu0 0.0
    %128 = vmatprep.subr.mxu0 0.0
    %129 = vmatpush1.msra.mxu0 0.0
    %130 = vmatprep.subr.mxu0 0.0
    %131 = vmatpush1.msra.mxu0 0.0
    %132 = vmatprep.subr.mxu0 0.0
    %133 = vmatpush1.msra.mxu0 0.0
    %134 = vmatprep.subr.mxu0 0.0
    %135 = vmatpush1.msra.mxu0 0.0
    %136 = vmatprep.subr.mxu0 0.0
    %137 = vmatpush1.msra.mxu0 0.0
    %138 = vmatprep.mubr.f32.mxu0 0.0
    %139 = vmatmul.mubr.f32.gmra.mrb[0].mxu0 %v69
    %v140 = vpop.f32.mrb[0].mxu0
    %v141 = vadd.f32 0.0, %v140
    %v142 = vpop.f32.mrb[0].mxu0
    %143 = vmatprep.mubr.f32.mxu0 0.0
    %144 = vmatmul.mubr.f32.gmra.mrb[0].mxu0 %v72
    %v145 = vpop.f32.mrb[0].mxu0
    %v146 = vadd.f32 0.0, %v145
    %v147 = vpop.f32.mrb[0].mxu0
    %148 = vdwg.mxu0
    %v150 = vsel %vm67, %v61, 0
    %v153 = vsel %vm67, %v62, 0
    %155 = vmatprep.subr.mxu0 0.0
    %156 = vmatpush1.msra.mxu0 %v63
    %157 = vmatprep.subr.mxu0 0.0
    %158 = vmatpush1.msra.mxu0 0.0
    %159 = vmatprep.subr.mxu0 0.0
    %160 = vmatpush1.msra.mxu0 0.0
    %161 = vmatprep.subr.mxu0 0.0
    %162 = vmatpush1.msra.mxu0 0.0
    %163 = vmatprep.subr.mxu0 0.0
    %164 = vmatpush1.msra.mxu0 0.0
    %165 = vmatprep.subr.mxu0 0.0
    %166 = vmatpush1.msra.mxu0 0.0
    %167 = vmatprep.subr.mxu0 0.0
    %168 = vmatpush1.msra.mxu0 0.0
    %169 = vmatprep.subr.mxu0 0.0
    %170 = vmatpush1.msra.mxu0 0.0
    %171 = vmatprep.subr.mxu0 0.0
    %172 = vmatpush1.msra.mxu0 0.0
    %173 = vmatprep.subr.mxu0 0.0
    %174 = vmatpush1.msra.mxu0 0.0
    %175 = vmatprep.subr.mxu0 0.0
    %176 = vmatpush1.msra.mxu0 0.0
    %177 = vmatprep.subr.mxu0 0.0
    %178 = vmatpush1.msra.mxu0 0.0
    %179 = vmatprep.subr.mxu0 0.0
    %180 = vmatpush1.msra.mxu0 0.0
    %181 = vmatprep.subr.mxu0 0.0
    %182 = vmatpush1.msra.mxu0 0.0
    %183 = vmatprep.subr.mxu0 0.0
    %184 = vmatpush1.msra.mxu0 0.0
    %185 = vmatprep.subr.mxu0 0.0
    %186 = vmatpush1.msra.mxu0 0.0
    %187 = vmatprep.subr.mxu0 0.0
    %188 = vmatpush1.msra.mxu0 0.0
    %189 = vmatprep.subr.mxu0 0.0
    %190 = vmatpush1.msra.mxu0 0.0
    %191 = vmatprep.subr.mxu0 0.0
    %192 = vmatpush1.msra.mxu0 0.0
    %193 = vmatprep.subr.mxu0 0.0
    %194 = vmatpush1.msra.mxu0 0.0
    %195 = vmatprep.subr.mxu0 0.0
    %196 = vmatpush1.msra.mxu0 0.0
    %197 = vmatprep.subr.mxu0 0.0
    %198 = vmatpush1.msra.mxu0 0.0
    %199 = vmatprep.subr.mxu0 0.0
    %200 = vmatpush1.msra.mxu0 0.0
    %201 = vmatprep.subr.mxu0 0.0
    %202 = vmatpush1.msra.mxu0 0.0
    %203 = vmatprep.subr.mxu0 0.0
    %204 = vmatpush1.msra.mxu0 0.0
    %205 = vmatprep.subr.mxu0 0.0
    %206 = vmatpush1.msra.mxu0 0.0
    %207 = vmatprep.subr.mxu0 0.0
    %208 = vmatpush1.msra.mxu0 0.0
    %209 = vmatprep.subr.mxu0 0.0
    %210 = vmatpush1.msra.mxu0 0.0
    %211 = vmatprep.subr.mxu0 0.0
    %212 = vmatpush1.msra.mxu0 0.0
    %213 = vmatprep.subr.mxu0 0.0
    %214 = vmatpush1.msra.mxu0 0.0
    %215 = vmatprep.subr.mxu0 0.0
    %216 = vmatpush1.msra.mxu0 0.0
    %217 = vmatprep.subr.mxu0 0.0
    %218 = vmatpush1.msra.mxu0 0.0
    %219 = vmatprep.mubr.f32.mxu0 0.0
    %220 = vmatmul.mubr.f32.gmra.mrb[0].mxu0 %v150
    %v221 = vpop.f32.mrb[0].mxu0
    %v222 = vadd.f32 %v141, %v221
    %v223 = vpop.f32.mrb[0].mxu0
    %224 = vmatprep.mubr.f32.mxu0 0.0
    %225 = vmatmul.mubr.f32.gmra.mrb[0].mxu0 %v153
    %v226 = vpop.f32.mrb[0].mxu0
    %v227 = vadd.f32 %v146, %v226
    %v228 = vpop.f32.mrb[0].mxu0
    %229 = vdwg.mxu0
    %v230 = vld [vmem:[%s4] sm:$0x1]
    %v232 = vlaneseq
    %v233 = vshrl.u32 %v232, 7
    %v234 = vsub.s32 0, %v233
    %v235 = vrot.slane %v230, %v234
    %v237 = vadd.f32 %v222, %v235
    %v238 = vadd.f32 %v227, %v235
    %v239 = vmax.f32 %v237, 0.0
    %v240 = vmax.f32 %v238, 0.0
    %v241 = vld [vmem:[#allocation2] sm:$0xff]
    %v242 = vld [vmem:[#allocation2 + $0x8] sm:$0xff]
    %v243 = vld [vmem:[#allocation2 + $0x10] sm:$0xff]
    %v244 = vld [vmem:[#allocation2 + $0x18] sm:$0xff]
    %v245 = vld [vmem:[#allocation2 + $0x20] sm:$0xff]
    %v246 = vld [vmem:[#allocation2 + $0x28] sm:$0xff]
    %v247 = vld [vmem:[#allocation2 + $0x30] sm:$0xff]
    %v248 = vld [vmem:[#allocation2 + $0x38] sm:$0xff]
    %v249 = vld [vmem:[#allocation2 + $0x40] sm:$0xff]
    %v250 = vld [vmem:[#allocation2 + $0x48] sm:$0xff]
    %v251 = vld [vmem:[#allocation2 + $0x50] sm:$0xff]
    %v252 = vld [vmem:[#allocation2 + $0x58] sm:$0xff]
    %v253 = vld [vmem:[#allocation2 + $0x60] sm:$0xff]
    %v254 = vld [vmem:[#allocation2 + $0x68] sm:$0xff]
    %v255 = vld [vmem:[#allocation2 + $0x70] sm:$0xff]
    %v256 = vld [vmem:[#allocation2 + $0x78] sm:$0xff]
    %v257 = vld [vmem:[%s6] sm:$0x1]
    %v259 = vlaneseq
    %v260 = vshrl.u32 %v259, 7
    %v261 = vsub.s32 0, %v260
    %v262 = vrot.slane %v257, %v261
    %264 = vmatprep.subr.mxu0 0.0
    %265 = vmatpush1.msra.mxu0 %v241
    %266 = vmatprep.subr.mxu0 0.0
    %267 = vmatpush1.msra.mxu0 %v242
    %268 = vmatprep.subr.mxu0 0.0
    %269 = vmatpush1.msra.mxu0 %v243
    %270 = vmatprep.subr.mxu0 0.0
    %271 = vmatpush1.msra.mxu0 %v244
    %272 = vmatprep.subr.mxu0 0.0
    %273 = vmatpush1.msra.mxu0 %v245
    %274 = vmatprep.subr.mxu0 0.0
    %275 = vmatpush1.msra.mxu0 %v246
    %276 = vmatprep.subr.mxu0 0.0
    %277 = vmatpush1.msra.mxu0 %v247
    %278 = vmatprep.subr.mxu0 0.0
    %279 = vmatpush1.msra.mxu0 %v248
    %280 = vmatprep.subr.mxu0 0.0
    %281 = vmatpush1.msra.mxu0 %v249
    %282 = vmatprep.subr.mxu0 0.0
    %283 = vmatpush1.msra.mxu0 %v250
    %284 = vmatprep.subr.mxu0 0.0
    %285 = vmatpush1.msra.mxu0 %v251
    %286 = vmatprep.subr.mxu0 0.0
    %287 = vmatpush1.msra.mxu0 %v252
    %288 = vmatprep.subr.mxu0 0.0
    %289 = vmatpush1.msra.mxu0 %v253
    %290 = vmatprep.subr.mxu0 0.0
    %291 = vmatpush1.msra.mxu0 %v254
    %292 = vmatprep.subr.mxu0 0.0
    %293 = vmatpush1.msra.mxu0 %v255
    %294 = vmatprep.subr.mxu0 0.0
    %295 = vmatpush1.msra.mxu0 %v256
    %296 = vmatprep.subr.mxu0 0.0
    %297 = vmatpush1.msra.mxu0 0.0
    %298 = vmatprep.subr.mxu0 0.0
    %299 = vmatpush1.msra.mxu0 0.0
    %300 = vmatprep.subr.mxu0 0.0
    %301 = vmatpush1.msra.mxu0 0.0
    %302 = vmatprep.subr.mxu0 0.0
    %303 = vmatpush1.msra.mxu0 0.0
    %304 = vmatprep.subr.mxu0 0.0
    %305 = vmatpush1.msra.mxu0 0.0
    %306 = vmatprep.subr.mxu0 0.0
    %307 = vmatpush1.msra.mxu0 0.0
    %308 = vmatprep.subr.mxu0 0.0
    %309 = vmatpush1.msra.mxu0 0.0
    %310 = vmatprep.subr.mxu0 0.0
    %311 = vmatpush1.msra.mxu0 0.0
    %312 = vmatprep.subr.mxu0 0.0
    %313 = vmatpush1.msra.mxu0 0.0
    %314 = vmatprep.subr.mxu0 0.0
    %315 = vmatpush1.msra.mxu0 0.0
    %316 = vmatprep.subr.mxu0 0.0
    %317 = vmatpush1.msra.mxu0 0.0
    %318 = vmatprep.subr.mxu0 0.0
    %319 = vmatpush1.msra.mxu0 0.0
    %320 = vmatprep.subr.mxu0 0.0
    %321 = vmatpush1.msra.mxu0 0.0
    %322 = vmatprep.subr.mxu0 0.0
    %323 = vmatpush1.msra.mxu0 0.0
    %324 = vmatprep.subr.mxu0 0.0
    %325 = vmatpush1.msra.mxu0 0.0
    %326 = vmatprep.subr.mxu0 0.0
    %327 = vmatpush1.msra.mxu0 0.0
    %328 = vmatprep.mubr.f32.mxu0 0.0
    %329 = vmatmul.mubr.f32.gmra.mrb[0].mxu0 %v239
    %v330 = vpop.f32.mrb[0].mxu0
    %v331 = vadd.f32 %v262, %v330
    %v332 = vpop.f32.mrb[0].mxu0
    %333 = vmatprep.mubr.f32.mxu0 0.0
    %334 = vmatmul.mubr.f32.gmra.mrb[0].mxu0 %v240
    %v335 = vpop.f32.mrb[0].mxu0
    %v336 = vadd.f32 %v262, %v335
    %v337 = vpop.f32.mrb[0].mxu0
    %338 = vdwg.mxu0
    %v339 = vmax.f32 %v331, 0.0
    %v340 = vmax.f32 %v336, 0.0
    %v341 = vld [vmem:[#allocation5] sm:$0xff]
    %v342 = vld [vmem:[#allocation5 + $0x8] sm:$0xff]
    %v343 = vld [vmem:[#allocation5 + $0x10] sm:$0xff]
    %v344 = vld [vmem:[#allocation5 + $0x18] sm:$0xff]
    %v345 = vld [vmem:[#allocation5 + $0x20] sm:$0xff]
    %v346 = vld [vmem:[#allocation5 + $0x28] sm:$0xff]
    %v347 = vld [vmem:[#allocation5 + $0x30] sm:$0xff]
    %v348 = vld [vmem:[#allocation5 + $0x38] sm:$0xff]
    %v349 = vld [vmem:[#allocation5 + $0x40] sm:$0xff]
    %v350 = vld [vmem:[#allocation5 + $0x48] sm:$0xff]
    %v351 = vld [vmem:[#allocation5 + $0x50] sm:$0xff]
    %v352 = vld [vmem:[#allocation5 + $0x58] sm:$0xff]
    %v353 = vld [vmem:[#allocation5 + $0x60] sm:$0xff]
    %v354 = vld [vmem:[#allocation5 + $0x68] sm:$0xff]
    %v355 = vld [vmem:[#allocation5 + $0x70] sm:$0xff]
    %v356 = vld [vmem:[#allocation5 + $0x78] sm:$0xff]
    %v357 = vld [vmem:[%s8] sm:$0x1]
    %v359 = vlaneseq
    %v360 = vshrl.u32 %v359, 7
    %v361 = vsub.s32 0, %v360
    %v362 = vrot.slane %v357, %v361
    %364 = vmatprep.subr.mxu0 0.0
    %365 = vmatpush1.msra.mxu0 %v341
    %366 = vmatprep.subr.mxu0 0.0
    %367 = vmatpush1.msra.mxu0 %v342
    %368 = vmatprep.subr.mxu0 0.0
    %369 = vmatpush1.msra.mxu0 %v343
    %370 = vmatprep.subr.mxu0 0.0
    %371 = vmatpush1.msra.mxu0 %v344
    %372 = vmatprep.subr.mxu0 0.0
    %373 = vmatpush1.msra.mxu0 %v345
    %374 = vmatprep.subr.mxu0 0.0
    %375 = vmatpush1.msra.mxu0 %v346
    %376 = vmatprep.subr.mxu0 0.0
    %377 = vmatpush1.msra.mxu0 %v347
    %378 = vmatprep.subr.mxu0 0.0
    %379 = vmatpush1.msra.mxu0 %v348
    %380 = vmatprep.subr.mxu0 0.0
    %381 = vmatpush1.msra.mxu0 %v349
    %382 = vmatprep.subr.mxu0 0.0
    %383 = vmatpush1.msra.mxu0 %v350
    %384 = vmatprep.subr.mxu0 0.0
    %385 = vmatpush1.msra.mxu0 %v351
    %386 = vmatprep.subr.mxu0 0.0
    %387 = vmatpush1.msra.mxu0 %v352
    %388 = vmatprep.subr.mxu0 0.0
    %389 = vmatpush1.msra.mxu0 %v353
    %390 = vmatprep.subr.mxu0 0.0
    %391 = vmatpush1.msra.mxu0 %v354
    %392 = vmatprep.subr.mxu0 0.0
    %393 = vmatpush1.msra.mxu0 %v355
    %394 = vmatprep.subr.mxu0 0.0
    %395 = vmatpush1.msra.mxu0 %v356
    %396 = vmatprep.subr.mxu0 0.0
    %397 = vmatpush1.msra.mxu0 0.0
    %398 = vmatprep.subr.mxu0 0.0
    %399 = vmatpush1.msra.mxu0 0.0
    %400 = vmatprep.subr.mxu0 0.0
    %401 = vmatpush1.msra.mxu0 0.0
    %402 = vmatprep.subr.mxu0 0.0
    %403 = vmatpush1.msra.mxu0 0.0
    %404 = vmatprep.subr.mxu0 0.0
    %405 = vmatpush1.msra.mxu0 0.0
    %406 = vmatprep.subr.mxu0 0.0
    %407 = vmatpush1.msra.mxu0 0.0
    %408 = vmatprep.subr.mxu0 0.0
    %409 = vmatpush1.msra.mxu0 0.0
    %410 = vmatprep.subr.mxu0 0.0
    %411 = vmatpush1.msra.mxu0 0.0
    %412 = vmatprep.subr.mxu0 0.0
    %413 = vmatpush1.msra.mxu0 0.0
    %414 = vmatprep.subr.mxu0 0.0
    %415 = vmatpush1.msra.mxu0 0.0
    %416 = vmatprep.subr.mxu0 0.0
    %417 = vmatpush1.msra.mxu0 0.0
    %418 = vmatprep.subr.mxu0 0.0
    %419 = vmatpush1.msra.mxu0 0.0
    %420 = vmatprep.subr.mxu0 0.0
    %421 = vmatpush1.msra.mxu0 0.0
    %422 = vmatprep.subr.mxu0 0.0
    %423 = vmatpush1.msra.mxu0 0.0
    %424 = vmatprep.subr.mxu0 0.0
    %425 = vmatpush1.msra.mxu0 0.0
    %426 = vmatprep.subr.mxu0 0.0
    %427 = vmatpush1.msra.mxu0 0.0
    %428 = vmatprep.mubr.f32.mxu0 0.0
    %429 = vmatmul.mubr.f32.gmra.mrb[0].mxu0 %v339
    %v430 = vpop.f32.mrb[0].mxu0
    %v431 = vadd.f32 %v362, %v430
    %v432 = vpop.f32.mrb[0].mxu0
    %433 = vmatprep.mubr.f32.mxu0 0.0
    %434 = vmatmul.mubr.f32.gmra.mrb[0].mxu0 %v340
    %v435 = vpop.f32.mrb[0].mxu0
    %v436 = vadd.f32 %v362, %v435
    %v437 = vpop.f32.mrb[0].mxu0
    %438 = vdwg.mxu0
    %439 = vst [vmem:[#allocation7] sm:$0xff] %v431
    %440 = vst [vmem:[#allocation7 + $0x8] sm:$0xff] %v436
    // Predicated region
    $region46: #{tpu_custom_call.1} parent=1 // pred_check
      _
    $region47: #{tpu_custom_call.1} parent=1 // pred_check_branch
      %442 = sbr.rel (0) target = $region49
    $region48: #{tpu_custom_call.1} parent=1 // pred_region
      %s444 = ssub.s32 256, 256
      %445 = vsyncadd [#allocation4], %s444
      %s446 = sshll.u32 [#allocation7], 4
      %s447 = int_to_ptr.vmem [resolvable:$true] %s446
      %452 = dma.vmem_to_hbm [thread:$0]  %s447, 256, %s9, [#allocation4], 128, 128, 8
    $region49: #{tpu_custom_call.1} parent=1 // pred_fallthru
      _
    // Predicated region
    $region50: #{tpu_custom_call.1} parent=1 // pred_check
      _
    $region51: #{tpu_custom_call.1} parent=1 // pred_check_branch
      %454 = sbr.rel (0) target = $region53
    $region52: #{tpu_custom_call.1} parent=1 // pred_region
      %455 = dma.done [#allocation4], 256
    $region53: #{tpu_custom_call.1} parent=1 // pred_fallthru
      _
    %456 = vsyncpa [#allocation3], 1
    %457 = vsyncpa [#allocation6], 1
    %458 = vsyncpa [#allocation4], 1

</llo_original>
